<compile_context>
chip_gen: v5e
topology: v5e:2x2
jax: 0.10.0
libtpu: 0.0.40
codegen_flags: <defaults>
</compile_context>

<pallas_src>
import jax
import jax.numpy as jnp
from jax.experimental import pallas as pl
from jax.experimental.pallas import tpu as pltpu


def _round_up(a, b):
    return (a + b - 1) // b * b


def hsigmoid_kernel(x_ref, o_ref):
    x = x_ref[...]
    # relu6(x + 3) * (1/6): clip lowers to VPU min/max, scale is a scalar mul.
    y = jnp.clip(x + 3.0, 0.0, 6.0) * (1.0 / 6.0)
    o_ref[...] = y.astype(o_ref.dtype)


def _num_tensorcores():
    """Best-effort TensorCore count (v7x has 2).  Falls back to 1."""
    try:
        info = pltpu.get_tpu_info()
        for name in ("num_cores_per_chip", "num_tensorcores", "num_cores"):
            n = getattr(info, name, None)
            if isinstance(n, int) and n > 0:
                return n
    except Exception:
        pass
    return 1


def hsigmoid_forward(x, *, out_dtype=None, target_block_bytes=8 << 20,
                     vmem_limit_bytes=48 << 20):
    """HSigmoid over an arbitrarily-shaped array via a lane-dense 2D tiling."""
    orig_shape = x.shape
    in_dtype = x.dtype
    out_dtype = in_dtype if out_dtype is None else jnp.dtype(out_dtype)
    total = x.size
    in_bytes = jnp.dtype(in_dtype).itemsize
    out_bytes = jnp.dtype(out_dtype).itemsize

    # Sublane packing: 8 rows per vreg for 4B dtypes, 16 for 2B, 32 for 1B.
    sublane = max(8, 32 // in_bytes)

    # Pick the largest lane-dense column count that divides the element count
    # exactly so no padding copy / output slice is needed (common case for
    # conv feature maps).
    cols = None
    for cand in (1024, 512, 256, 128):
        if total % cand == 0:
            cols = cand
            break

    if cols is not None:
        rows = total // cols
        x2 = x.reshape(rows, cols)
        sliced = False
    else:
        # Fallback for sizes not divisible by 128: pad the flattened array up
        # to whole 128-lane rows and slice the result back afterwards.
        cols = 128
        rows = pl.cdiv(total, cols)
        flat = x.reshape(-1)
        pad = rows * cols - total
        flat = jnp.concatenate([flat, jnp.zeros((pad,), in_dtype)])
        x2 = flat.reshape(rows, cols)
        sliced = True

    # ~8 MiB input block, sublane aligned.  Double-buffered in+out stays under
    # the explicit 48 MiB scoped-VMEM limit on all generations.
    max_block_rows = max(sublane,
                         (target_block_bytes // (cols * in_bytes))
                         // sublane * sublane)

    if rows <= max_block_rows:
        # Whole array in one block (block dim == full array dim is always a
        # legal BlockSpec, even if not a multiple of 8).
        block_rows = rows
        # On a 2-TensorCore chip (v7x), split into two blocks so the
        # "parallel" grid axis can be sharded across cores -- only when the
        # halves are sublane aligned and each half moves >= 512 KiB.
        half = rows // 2
        if (_num_tensorcores() >= 2
                and half > 0
                and half % sublane == 0
                and rows % 2 == 0
                and half * cols * in_bytes >= (512 << 10)):
            block_rows = half
    else:
        block_rows = max_block_rows

    grid = (pl.cdiv(rows, block_rows),)

    cost = pl.CostEstimate(
        flops=4 * total,
        transcendentals=0,
        bytes_accessed=total * (in_bytes + out_bytes),
    )

    out = pl.pallas_call(
        hsigmoid_kernel,
        out_shape=jax.ShapeDtypeStruct((rows, cols), out_dtype),
        grid=grid,
        in_specs=[pl.BlockSpec((block_rows, cols), lambda i: (i, 0))],
        out_specs=pl.BlockSpec((block_rows, cols), lambda i: (i, 0)),
        compiler_params=pltpu.CompilerParams(
            dimension_semantics=("parallel",),
            vmem_limit_bytes=vmem_limit_bytes),
        cost_estimate=cost,
    )(x2)

    if sliced:
        out = out.reshape(-1)[:total]
    return out.reshape(orig_shape)


def hsigmoid_ref(x):
    """Pure-JAX reference mirroring the PyTorch forward."""
    return jnp.clip(x + 3.0, 0.0, 6.0) / 6.0


if __name__ == "__main__":
    key = jax.random.PRNGKey(0)
    N, C, H, W = 2, 4, 16, 16
    x = jax.random.normal(key, (N, C, H, W), jnp.float32) * 3.0

    out = hsigmoid_forward(x)
    jax.block_until_ready(out)

    ref = hsigmoid_ref(x)
    assert out.shape == x.shape
    assert out.dtype == x.dtype
    assert jnp.allclose(out, ref, atol=1e-6, rtol=1e-6), "mismatch vs reference"
    print("KERNEL_OK")
</pallas_src>

<mosaic_0001>
module attributes {stable_mosaic.version = 11 : i64} {
  func.func @hsigmoid_kernel(%arg0: i32, %arg1: memref<2x1024xf32, #tpu.memory_space<vmem>>, %arg2: memref<2x1024xf32, #tpu.memory_space<vmem>>) attributes {dimension_semantics = [#tpu.dimension_semantics<parallel>], iteration_bounds = array<i64: 1>, scalar_prefetch = 0 : i64, scratch_operands = 0 : i64, tpu.core_type = #tpu.core_type<tc>, window_params = [{transform_indices = @transform_0, window_bounds = array<i64: 2, 1024>}, {transform_indices = @transform_1, window_bounds = array<i64: 2, 1024>}]} {
    %c0 = arith.constant 0 : index
    %c0_0 = arith.constant 0 : index
    %0 = vector.load %arg1[%c0, %c0_0] : memref<2x1024xf32, #tpu.memory_space<vmem>>, vector<2x1024xf32>
    %cst = arith.constant 3.000000e+00 : f32
    %1 = vector.broadcast %cst : f32 to vector<2x1024xf32>
    %2 = arith.addf %0, %1 : vector<2x1024xf32>
    %cst_1 = arith.constant 0.000000e+00 : f32
    %cst_2 = arith.constant 6.000000e+00 : f32
    %3 = vector.broadcast %cst_1 : f32 to vector<2x1024xf32>
    %4 = arith.maximumf %3, %2 : vector<2x1024xf32>
    %5 = vector.broadcast %cst_2 : f32 to vector<2x1024xf32>
    %6 = arith.minimumf %5, %4 : vector<2x1024xf32>
    %cst_3 = arith.constant 0.166666672 : f32
    %7 = vector.broadcast %cst_3 : f32 to vector<2x1024xf32>
    %8 = arith.mulf %6, %7 : vector<2x1024xf32>
    %c0_4 = arith.constant 0 : index
    %c0_5 = arith.constant 0 : index
    %9 = vector.load %arg2[%c0_4, %c0_5] : memref<2x1024xf32, #tpu.memory_space<vmem>>, vector<2x1024xf32>
    tpu.vector_store %arg2[%c0_4, %c0_5], %8 {strides = array<i32>} : memref<2x1024xf32, #tpu.memory_space<vmem>>, vector<2x1024xf32>,
    return
  }
  func.func @transform_0(%arg0: i32) -> (i32, i32) {
    %c0_i32 = arith.constant 0 : i32
    %c0_i32_0 = arith.constant 0 : i32
    return %arg0, %c0_i32 : i32, i32
  }
  func.func @transform_1(%arg0: i32) -> (i32, i32) {
    %c0_i32 = arith.constant 0 : i32
    %c0_i32_0 = arith.constant 0 : i32
    return %arg0, %c0_i32 : i32, i32
  }
}

</mosaic_0001>

<llo_original>
// kernel: tpu_custom_call.1
$region0: #{tpu_custom_call.1}
  #allocation0 [shape = 'u32[]', space=smem, size = 0x4, offset = 0x4, fixed_abs, tag = 'smem constant byte address 0x4 - core index']
  #allocation1 [shape = 'u32[72,128]{1,0:T(1,128)}', space=vmem, size = 0x9000, scoped, tag = 'internal scratch']
  %s0 = inlined_call_operand.hbm [shape: f32[2,1024], index: 0, kind: input, shape index: {}]
  %s1 = inlined_call_operand.hbm [shape: f32[2,1024], index: 1, kind: output, shape index: {}]
  %s2 = sld [smem:[#allocation0]]
  $region18: #{tpu_custom_call.1} parent=0
    _
  %s4 = ssub.s32 1, %s2
  %s5 = scalar_select 0, %s4, %s2
  $region1: #{tpu_custom_call.1} parent=0
    #allocation2 [shape = 'u8[8192]{0}', space=vmem, size = 0x2000, scoped, tag = 'input window, operand 0, single buffered']
    #allocation3 [shape = 's32[1]{0}', space=sflag, size = 0x4, scoped, tag = 'scoped memory for tpu_custom_call.1']
    #allocation4 [shape = 's32[1]{0}', space=sflag, size = 0x4, scoped, tag = 'scoped memory for tpu_custom_call.1']
    #allocation5 [shape = 'u8[8192]{0}', space=vmem, size = 0x2000, scoped, tag = 'output window, operand 0, single buffered']
    %6 = vsyncpa [#allocation3], 0
    %7 = vsyncpa [#allocation4], 0
    // Predicated region
    $region2: #{tpu_custom_call.1} parent=1 // pred_check
      _
    $region3: #{tpu_custom_call.1} parent=1 // pred_check_branch
      %9 = sbr.rel (0) target = $region5
    $region4: #{tpu_custom_call.1} parent=1 // pred_region
      %11 = vsyncadd [#allocation3], 0
      %s13 = sshll.u32 %s0, 4
      %s14 = int_to_ptr.hbm [resolvable:$true] %s13
      %s15 = sshll.u32 [#allocation2], 4
      %s16 = int_to_ptr.vmem [resolvable:$true] %s15
      %18 = dma.hbm_to_vmem [thread:$0]  %s14, 256, %s16, [#allocation3]
    $region5: #{tpu_custom_call.1} parent=1 // pred_fallthru
      _
    // Predicated region
    $region6: #{tpu_custom_call.1} parent=1 // pred_check
      _
    $region7: #{tpu_custom_call.1} parent=1 // pred_check_branch
      %20 = sbr.rel (0) target = $region9
    $region8: #{tpu_custom_call.1} parent=1 // pred_region
      %22 = dma.done [#allocation3], 256
    $region9: #{tpu_custom_call.1} parent=1 // pred_fallthru
      _
    %v23 = vld [vmem:[#allocation2] sm:$0xff]
    %v24 = vld [vmem:[#allocation2 + $0x8] sm:$0xff]
    %v25 = vadd.f32 %v23, 3.0
    %v26 = vadd.f32 %v24, 3.0
    %v27 = vmax.f32 %v25, 0.0
    %v28 = vmax.f32 %v26, 0.0
    %v29 = vmin.f32 %v27, 6.0
    %v30 = vmin.f32 %v28, 6.0
    %v31 = vmul.f32 %v29, 0.16666667
    %v32 = vmul.f32 %v30, 0.16666667
    %33 = vst [vmem:[#allocation5] sm:$0xff] %v31
    %34 = vst [vmem:[#allocation5 + $0x8] sm:$0xff] %v32
    // Predicated region
    $region10: #{tpu_custom_call.1} parent=1 // pred_check
      _
    $region11: #{tpu_custom_call.1} parent=1 // pred_check_branch
      %36 = sbr.rel (0) target = $region13
    $region12: #{tpu_custom_call.1} parent=1 // pred_region
      %38 = vsyncadd [#allocation4], 0
      %s40 = sshll.u32 [#allocation5], 4
      %s41 = int_to_ptr.vmem [resolvable:$true] %s40
      %s42 = sshll.u32 %s1, 4
      %s43 = int_to_ptr.hbm [resolvable:$true] %s42
      %45 = dma.vmem_to_hbm [thread:$0]  %s41, 256, %s43, [#allocation4]
    $region13: #{tpu_custom_call.1} parent=1 // pred_fallthru
      _
    // Predicated region
    $region14: #{tpu_custom_call.1} parent=1 // pred_check
      _
    $region15: #{tpu_custom_call.1} parent=1 // pred_check_branch
      %47 = sbr.rel (0) target = $region17
    $region16: #{tpu_custom_call.1} parent=1 // pred_region
      %49 = dma.done [#allocation4], 256
    $region17: #{tpu_custom_call.1} parent=1 // pred_fallthru
      _
    %50 = vsyncpa [#allocation3], 1
    %51 = vsyncpa [#allocation4], 1

</llo_original>
